<compile_context>
chip_gen: v6e
topology: v6e:2x2x1
jax: 0.10.0
libtpu: 0.0.40
codegen_flags: <defaults>
</compile_context>

<pallas_src>
import functools
import math

import jax
import jax.numpy as jnp
from jax.experimental import pallas as pl
from jax.experimental.pallas import tpu as pltpu

# ---------------------------------------------------------------------------
# Tiling helpers
# ---------------------------------------------------------------------------
_ROW_TILE_CAP = 512            # rows per grid step (f32 sublane multiple of 8)
_COL_TILE_CAP = 512            # output columns per grid step (lane multiple of 128)
_VMEM_LIMIT_BYTES = 48 * 1024 * 1024   # > 32 MiB default scoped limit


def _round_up(n, m):
    return (n + m - 1) // m * m


def _row_tile(rows):
    # Large tile, multiple of 8 sublanes; rows get padded up to it.
    return min(_ROW_TILE_CAP, _round_up(rows, 8))


def _col_tile(n):
    # Lane-dense column tile: multiple of 128 that divides n, else full width.
    if n % 128 != 0:
        return n
    t = max(128, (min(_COL_TILE_CAP, n) // 128) * 128)
    while n % t != 0:
        t -= 128
    return t


def _pad_rows(a, rows_p):
    r = a.shape[0]
    if r == rows_p:
        return a
    return jnp.pad(a, ((0, rows_p - r), (0, 0)))


def _cparams(semantics):
    return pltpu.CompilerParams(
        dimension_semantics=semantics,
        vmem_limit_bytes=_VMEM_LIMIT_BYTES,
    )


# ---------------------------------------------------------------------------
# Kernels
# ---------------------------------------------------------------------------
def _norm_matmul_kernel(x_ref, nw_ref, w_ref, o_ref, *, eps):
    """out = (norm_w * rmsnorm(x)) @ W   for one (rows, cols) tile."""
    x = x_ref[...].astype(jnp.float32)
    ms = jnp.mean(x * x, axis=-1, keepdims=True)
    xn = (x * jax.lax.rsqrt(ms + eps)).astype(x_ref.dtype)
    xn = nw_ref[...] * xn
    o_ref[...] = jnp.dot(
        xn, w_ref[...], preferred_element_type=jnp.float32
    ).astype(o_ref.dtype)


def _matmul_residual_kernel(x_ref, w_ref, r_ref, o_ref):
    """out = residual + x @ W."""
    acc = jnp.dot(x_ref[...], w_ref[...], preferred_element_type=jnp.float32)
    o_ref[...] = (r_ref[...].astype(jnp.float32) + acc).astype(o_ref.dtype)


def _ffn_kernel(x_ref, nw_ref, w1_ref, w3_ref, w2_ref, o_ref, acc_ref, *, eps):
    """Fully-fused SwiGLU FFN with residual.

    Per (row-tile, hidden-chunk) step:
        xn   = ffn_norm_w * rmsnorm(x)
        acc += (silu(xn @ W1[:, chunk]) * (xn @ W3[:, chunk])) @ W2[chunk, :]
    Finalize:  out = x + acc
    """
    k = pl.program_id(1)

    @pl.when(k == 0)
    def _():
        acc_ref[...] = jnp.zeros_like(acc_ref)

    x = x_ref[...].astype(jnp.float32)
    ms = jnp.mean(x * x, axis=-1, keepdims=True)
    xn = (x * jax.lax.rsqrt(ms + eps)).astype(x_ref.dtype)
    xn = nw_ref[...] * xn

    g = jnp.dot(xn, w1_ref[...], preferred_element_type=jnp.float32)
    u = jnp.dot(xn, w3_ref[...], preferred_element_type=jnp.float32)
    gated = (g * (1.0 / (1.0 + jnp.exp(-g))) * u).astype(x_ref.dtype)
    acc_ref[...] += jnp.dot(gated, w2_ref[...], preferred_element_type=jnp.float32)

    @pl.when(k == pl.num_programs(1) - 1)
    def _():
        o_ref[...] = (x_ref[...].astype(jnp.float32) + acc_ref[...]).astype(o_ref.dtype)


def _attn_kernel(q_ref, k_ref, v_ref, o_ref, *, scale):
    """One (batch*head) slice: softmax(q k^T * scale) v."""
    q = q_ref[0].astype(jnp.float32)
    k = k_ref[0].astype(jnp.float32)
    v = v_ref[0]
    s = jax.lax.dot_general(
        q, k, (((1,), (1,)), ((), ())), preferred_element_type=jnp.float32
    ) * scale
    s = s - jnp.max(s, axis=-1, keepdims=True)
    p = jnp.exp(s)
    p = p * pl.reciprocal(jnp.sum(p, axis=-1, keepdims=True), approx=False)
    p = p.astype(q_ref.dtype)
    o_ref[0] = jnp.dot(
        p, v.astype(p.dtype), preferred_element_type=jnp.float32
    ).astype(o_ref.dtype)


# ---------------------------------------------------------------------------
# Pallas wrappers
# ---------------------------------------------------------------------------
def fused_norm_matmul(x2d, norm_w, w, eps):
    """x2d: (rows, d); norm_w: (d,); w: (d, n). Returns (rows, n)."""
    rows, d = x2d.shape
    n = w.shape[1]
    tr = _row_tile(rows)
    rows_p = _round_up(rows, tr)
    tc = _col_tile(n)
    xp = _pad_rows(x2d, rows_p)
    out = pl.pallas_call(
        functools.partial(_norm_matmul_kernel, eps=eps),
        out_shape=jax.ShapeDtypeStruct((rows_p, n), x2d.dtype),
        grid=(rows_p // tr, n // tc),
        in_specs=[
            pl.BlockSpec((tr, d), lambda i, j: (i, 0)),
            pl.BlockSpec((1, d), lambda i, j: (0, 0)),
            pl.BlockSpec((d, tc), lambda i, j: (0, j)),
        ],
        out_specs=pl.BlockSpec((tr, tc), lambda i, j: (i, j)),
        compiler_params=_cparams(("parallel", "parallel")),
    )(xp, norm_w.reshape(1, d), w)
    return out[:rows]


def matmul_residual(x2d, w, res2d):
    """x2d: (rows, k); w: (k, n); res2d: (rows, n). Returns res + x @ w."""
    rows, k = x2d.shape
    n = w.shape[1]
    tr = _row_tile(rows)
    rows_p = _round_up(rows, tr)
    tc = _col_tile(n)
    xp = _pad_rows(x2d, rows_p)
    rp = _pad_rows(res2d, rows_p)
    out = pl.pallas_call(
        _matmul_residual_kernel,
        out_shape=jax.ShapeDtypeStruct((rows_p, n), res2d.dtype),
        grid=(rows_p // tr, n // tc),
        in_specs=[
            pl.BlockSpec((tr, k), lambda i, j: (i, 0)),
            pl.BlockSpec((k, tc), lambda i, j: (0, j)),
            pl.BlockSpec((tr, tc), lambda i, j: (i, j)),
        ],
        out_specs=pl.BlockSpec((tr, tc), lambda i, j: (i, j)),
        compiler_params=_cparams(("parallel", "parallel")),
    )(xp, w, rp)
    return out[:rows]


def fused_ffn(x2d, norm_w, w1t, w3t, w2t, eps):
    """Fused ffn_norm + SwiGLU + down-proj + residual.

    x2d: (rows, d); w1t/w3t: (d, hidden); w2t: (hidden, d).
    Returns x2d + W2(silu(W1(xn)) * W3(xn)) with xn = norm_w * rmsnorm(x2d).
    """
    rows, d = x2d.shape
    hidden = w1t.shape[1]
    tr = _row_tile(rows)
    rows_p = _round_up(rows, tr)
    th = _col_tile(hidden)
    xp = _pad_rows(x2d, rows_p)
    out = pl.pallas_call(
        functools.partial(_ffn_kernel, eps=eps),
        out_shape=jax.ShapeDtypeStruct((rows_p, d), x2d.dtype),
        grid=(rows_p // tr, hidden // th),
        in_specs=[
            pl.BlockSpec((tr, d), lambda i, k: (i, 0)),
            pl.BlockSpec((1, d), lambda i, k: (0, 0)),
            pl.BlockSpec((d, th), lambda i, k: (0, k)),
            pl.BlockSpec((d, th), lambda i, k: (0, k)),
            pl.BlockSpec((th, d), lambda i, k: (k, 0)),
        ],
        out_specs=pl.BlockSpec((tr, d), lambda i, k: (i, 0)),
        scratch_shapes=[pltpu.VMEM((tr, d), jnp.float32)],
        compiler_params=_cparams(("parallel", "arbitrary")),
    )(xp, norm_w.reshape(1, d), w1t, w3t, w2t)
    return out[:rows]


def attention(qh, kh, vh, scale):
    """qh: (BH, S, Dh); kh, vh: (BH, L, Dh). Returns (BH, S, Dh)."""
    bh, s, dh = qh.shape
    l = kh.shape[1]
    return pl.pallas_call(
        functools.partial(_attn_kernel, scale=scale),
        out_shape=jax.ShapeDtypeStruct((bh, s, dh), qh.dtype),
        grid=(bh,),
        in_specs=[
            pl.BlockSpec((1, s, dh), lambda i: (i, 0, 0)),
            pl.BlockSpec((1, l, dh), lambda i: (i, 0, 0)),
            pl.BlockSpec((1, l, dh), lambda i: (i, 0, 0)),
        ],
        out_specs=pl.BlockSpec((1, s, dh), lambda i: (i, 0, 0)),
        compiler_params=_cparams(("parallel",)),
    )(qh, kh, vh)


# ---------------------------------------------------------------------------
# RoPE / KV-cache helpers (plain JAX; see TODO at top)
# ---------------------------------------------------------------------------
def precompute_freqs_complex(head_dim, start_pos, seq_len, theta=10000.0):
    inv = 1.0 / (theta ** (jnp.arange(0, head_dim, 2, dtype=jnp.float32) / head_dim))
    t = jnp.arange(start_pos, start_pos + seq_len, dtype=jnp.float32)
    ang = jnp.outer(t, inv)
    return jax.lax.complex(jnp.cos(ang), jnp.sin(ang))  # (seq, head_dim//2)


def apply_rope(x, freqs_complex):
    # x: (B, S, H, Dh) -> complex pairs, multiply, back to real.
    b, s, h, dh = x.shape
    xf = x.astype(jnp.float32).reshape(b, s, h, dh // 2, 2)
    xc = jax.lax.complex(xf[..., 0], xf[..., 1])
    fc = freqs_complex.reshape(1, s, 1, dh // 2)
    xr = xc * fc
    out = jnp.stack([jnp.real(xr), jnp.imag(xr)], axis=-1).reshape(b, s, h, dh)
    return out.astype(x.dtype)


def repeat_kv(x, n_rep):
    if n_rep == 1:
        return x
    b, s, h, d = x.shape
    return jnp.broadcast_to(
        x[:, :, :, None, :], (b, s, h, n_rep, d)
    ).reshape(b, s, h * n_rep, d)


# ---------------------------------------------------------------------------
# EncoderBlock forward (Pallas path)
# ---------------------------------------------------------------------------
def encoder_block_forward(x, start_pos, freqs_complex, params, cache_k, cache_v,
                          n_heads, n_kv_heads, eps):
    b, s, d = x.shape
    h, hkv = n_heads, n_kv_heads
    dh = d // h
    n_rep = h // hkv
    rows = b * s
    x2d = x.reshape(rows, d)

    # --- fused attention_norm + QKV projection (one lane-dense matmul) ---
    wqkv = jnp.concatenate(
        [params["wq"].T, params["wk"].T, params["wv"].T], axis=1
    )  # (d, h*dh + 2*hkv*dh)
    qkv = fused_norm_matmul(x2d, params["attn_norm"], wqkv, eps)
    qd, kvd = h * dh, hkv * dh
    q = qkv[:, :qd].reshape(b, s, h, dh)
    k = qkv[:, qd:qd + kvd].reshape(b, s, hkv, dh)
    v = qkv[:, qd + kvd:].reshape(b, s, hkv, dh)

    # --- RoPE + KV cache update ---
    q = apply_rope(q, freqs_complex)
    k = apply_rope(k, freqs_complex)
    cache_k = jax.lax.dynamic_update_slice(cache_k, k.astype(cache_k.dtype),
                                           (0, start_pos, 0, 0))
    cache_v = jax.lax.dynamic_update_slice(cache_v, v.astype(cache_v.dtype),
                                           (0, start_pos, 0, 0))
    kv_len = start_pos + s
    keys = repeat_kv(cache_k[:b, :kv_len], n_rep)
    values = repeat_kv(cache_v[:b, :kv_len], n_rep)

    # --- attention kernel (one grid step per batch*head) ---
    qh = q.transpose(0, 2, 1, 3).reshape(b * h, s, dh)
    kh = keys.transpose(0, 2, 1, 3).reshape(b * h, kv_len, dh).astype(q.dtype)
    vh = values.transpose(0, 2, 1, 3).reshape(b * h, kv_len, dh).astype(q.dtype)
    attn = attention(qh, kh, vh, 1.0 / math.sqrt(dh))
    attn = attn.reshape(b, h, s, dh).transpose(0, 2, 1, 3).reshape(rows, h * dh)

    # --- output projection + residual ---
    h_res = matmul_residual(attn, params["wo"].T, x2d)

    # --- fully-fused ffn_norm + SwiGLU + down-proj + residual ---
    out = fused_ffn(h_res, params["ffn_norm"], params["w1"].T, params["w3"].T,
                    params["w2"].T, eps)

    return out.reshape(b, s, d), cache_k, cache_v


# ---------------------------------------------------------------------------
# Pure-JAX reference (mirrors the intended PyTorch semantics)
# ---------------------------------------------------------------------------
def _ref_rmsnorm(x, w, eps):
    x32 = x.astype(jnp.float32)
    n = x32 * jax.lax.rsqrt(jnp.mean(x32 * x32, axis=-1, keepdims=True) + eps)
    return w * n.astype(x.dtype)


def ref_encoder_block(x, start_pos, freqs_complex, params, cache_k, cache_v,
                      n_heads, n_kv_heads, eps):
    hp = jax.lax.Precision.HIGHEST
    b, s, d = x.shape
    h, hkv = n_heads, n_kv_heads
    dh = d // h
    n_rep = h // hkv

    xn = _ref_rmsnorm(x, params["attn_norm"], eps)
    q = jnp.einsum("bsd,od->bso", xn, params["wq"], precision=hp).reshape(b, s, h, dh)
    k = jnp.einsum("bsd,od->bso", xn, params["wk"], precision=hp).reshape(b, s, hkv, dh)
    v = jnp.einsum("bsd,od->bso", xn, params["wv"], precision=hp).reshape(b, s, hkv, dh)
    q = apply_rope(q, freqs_complex)
    k = apply_rope(k, freqs_complex)
    cache_k = jax.lax.dynamic_update_slice(cache_k, k, (0, start_pos, 0, 0))
    cache_v = jax.lax.dynamic_update_slice(cache_v, v, (0, start_pos, 0, 0))
    keys = repeat_kv(cache_k[:b, :start_pos + s], n_rep)
    values = repeat_kv(cache_v[:b, :start_pos + s], n_rep)
    qh = q.transpose(0, 2, 1, 3)
    kh = keys.transpose(0, 2, 1, 3)
    vh = values.transpose(0, 2, 1, 3)
    scores = jnp.einsum("bhqd,bhkd->bhqk", qh, kh, precision=hp) / math.sqrt(dh)
    p = jax.nn.softmax(scores.astype(jnp.float32), axis=-1).astype(qh.dtype)
    o = jnp.einsum("bhqk,bhkd->bhqd", p, vh, precision=hp)
    o = o.transpose(0, 2, 1, 3).reshape(b, s, h * dh)
    h_res = x + jnp.einsum("bso,do->bsd", o, params["wo"], precision=hp)
    hn = _ref_rmsnorm(h_res, params["ffn_norm"], eps)
    g = jnp.einsum("bsd,hd->bsh", hn, params["w1"], precision=hp)
    u = jnp.einsum("bsd,hd->bsh", hn, params["w3"], precision=hp)
    ff = jnp.einsum("bsh,dh->bsd", jax.nn.silu(g) * u, params["w2"], precision=hp)
    return h_res + ff


# ---------------------------------------------------------------------------
# Main
# ---------------------------------------------------------------------------
if __name__ == "__main__":
    # Small, module-consistent shapes: dim divisible by n_heads, head_dim even,
    # dim a multiple of 128 (lane-dense).
    B, S, D, H = 2, 8, 128, 4
    HKV = H                      # n_kv_heads defaults to n_heads
    DH = D // H
    EPS = 1e-5                   # ModelArgs.norm_eps
    MAX_BATCH, MAX_SEQ = 2, 16
    MULTIPLE_OF = 128
    START_POS = 0

    hidden = 4 * D
    hidden = int(2 * hidden / 3)
    hidden = MULTIPLE_OF * ((hidden + MULTIPLE_OF - 1) // MULTIPLE_OF)  # 384

    ks = jax.random.split(jax.random.PRNGKey(0), 16)

    def _linear(k, out_f, in_f):
        return jax.random.normal(k, (out_f, in_f), jnp.float32) * (1.0 / math.sqrt(in_f))

    params = {
        "attn_norm": 1.0 + 0.05 * jax.random.normal(ks[0], (D,), jnp.float32),
        "ffn_norm": 1.0 + 0.05 * jax.random.normal(ks[1], (D,), jnp.float32),
        "wq": _linear(ks[2], H * DH, D),
        "wk": _linear(ks[3], HKV * DH, D),
        "wv": _linear(ks[4], HKV * DH, D),
        "wo": _linear(ks[5], D, H * DH),
        "w1": _linear(ks[6], hidden, D),
        "w2": _linear(ks[7], D, hidden),
        "w3": _linear(ks[8], hidden, D),
    }
    x = jax.random.normal(ks[9], (B, S, D), jnp.float32)
    cache_k = jnp.zeros((MAX_BATCH, MAX_SEQ, HKV, DH), jnp.float32)
    cache_v = jnp.zeros((MAX_BATCH, MAX_SEQ, HKV, DH), jnp.float32)
    freqs = precompute_freqs_complex(DH, START_POS, S)

    out, new_ck, new_cv = encoder_block_forward(
        x, START_POS, freqs, params, cache_k, cache_v, H, HKV, EPS
    )
    jax.block_until_ready(out)

    ref = ref_encoder_block(
        x, START_POS, freqs, params, cache_k, cache_v, H, HKV, EPS
    )

    assert out.shape == x.shape
    max_err = float(jnp.max(jnp.abs(out - ref)))
    assert bool(jnp.allclose(out, ref, atol=2e-2, rtol=2e-2)), f"max abs err {max_err}"

    print("KERNEL_OK")
</pallas_src>

<mosaic_0001>
module attributes {stable_mosaic.version = 11 : i64} {
  func.func @_norm_matmul_kernel(%arg0: i32, %arg1: i32, %arg2: memref<16x128xf32, #tpu.memory_space<vmem>>, %arg3: memref<1x128xf32, #tpu.memory_space<vmem>>, %arg4: memref<128x384xf32, #tpu.memory_space<vmem>>, %arg5: memref<16x384xf32, #tpu.memory_space<vmem>>) attributes {dimension_semantics = [#tpu.dimension_semantics<parallel>, #tpu.dimension_semantics<parallel>], iteration_bounds = array<i64: 1, 1>, scalar_prefetch = 0 : i64, scratch_operands = 0 : i64, tpu.core_type = #tpu.core_type<tc>, window_params = [{transform_indices = @transform_0, window_bounds = array<i64: 16, 128>}, {pipeline_mode = #tpu.pipeline_mode<synchronous>, transform_indices = @transform_1, window_bounds = array<i64: 1, 128>}, {transform_indices = @transform_2, window_bounds = array<i64: 128, 384>}, {transform_indices = @transform_3, window_bounds = array<i64: 16, 384>}]} {
    %c0 = arith.constant 0 : index
    %c0_0 = arith.constant 0 : index
    %0 = vector.load %arg2[%c0, %c0_0] : memref<16x128xf32, #tpu.memory_space<vmem>>, vector<16x128xf32>
    %1 = arith.mulf %0, %0 : vector<16x128xf32>
    %cst = arith.constant dense<0.000000e+00> : vector<16xf32>
    %2 = vector.multi_reduction <add>, %1, %cst [1] : vector<16x128xf32> to vector<16xf32>
    %3 = vector.shape_cast %2 : vector<16xf32> to vector<16x1xf32>
    %cst_1 = arith.constant 1.280000e+02 : f32
    %4 = vector.broadcast %cst_1 : f32 to vector<16x1xf32>
    %5 = arith.divf %3, %4 : vector<16x1xf32>
    %cst_2 = arith.constant 9.99999974E-6 : f32
    %6 = vector.broadcast %cst_2 : f32 to vector<16x1xf32>
    %7 = arith.addf %5, %6 : vector<16x1xf32>
    %8 = math.rsqrt %7 : vector<16x1xf32>
    %9 = vector.broadcast %8 : vector<16x1xf32> to vector<16x128xf32>
    %10 = arith.mulf %0, %9 : vector<16x128xf32>
    %c0_3 = arith.constant 0 : index
    %c0_4 = arith.constant 0 : index
    %11 = vector.load %arg3[%c0_3, %c0_4] : memref<1x128xf32, #tpu.memory_space<vmem>>, vector<1x128xf32>
    %12 = vector.broadcast %11 : vector<1x128xf32> to vector<16x128xf32>
    %13 = arith.mulf %12, %10 : vector<16x128xf32>
    %c0_5 = arith.constant 0 : index
    %c0_6 = arith.constant 0 : index
    %14 = vector.load %arg4[%c0_5, %c0_6] : memref<128x384xf32, #tpu.memory_space<vmem>>, vector<128x384xf32>
    %cst_7 = arith.constant dense<0.000000e+00> : vector<16x384xf32>
    %15 = tpu.matmul %13, %14, %cst_7 {dimension_numbers = #tpu.dot_dimension_numbers<[1], [0], [0], [1], [0, 0, 1, 1], [], []>} : vector<16x128xf32>, vector<128x384xf32>, vector<16x384xf32> -> vector<16x384xf32>
    %c0_8 = arith.constant 0 : index
    %c0_9 = arith.constant 0 : index
    %16 = vector.load %arg5[%c0_8, %c0_9] : memref<16x384xf32, #tpu.memory_space<vmem>>, vector<16x384xf32>
    tpu.vector_store %arg5[%c0_8, %c0_9], %15 {strides = array<i32>} : memref<16x384xf32, #tpu.memory_space<vmem>>, vector<16x384xf32>,
    return
  }
  func.func @transform_0(%arg0: i32, %arg1: i32) -> (i32, i32) {
    %c0_i32 = arith.constant 0 : i32
    %c0_i32_0 = arith.constant 0 : i32
    return %arg0, %c0_i32 : i32, i32
  }
  func.func @transform_1(%arg0: i32, %arg1: i32) -> (i32, i32) {
    %c0_i32 = arith.constant 0 : i32
    %c0_i32_0 = arith.constant 0 : i32
    %c0_i32_1 = arith.constant 0 : i32
    return %c0_i32, %c0_i32_0 : i32, i32
  }
  func.func @transform_2(%arg0: i32, %arg1: i32) -> (i32, i32) {
    %c0_i32 = arith.constant 0 : i32
    %c0_i32_0 = arith.constant 0 : i32
    return %c0_i32, %arg1 : i32, i32
  }
  func.func @transform_3(%arg0: i32, %arg1: i32) -> (i32, i32) {
    %c0_i32 = arith.constant 0 : i32
    return %arg0, %arg1 : i32, i32
  }
}

</mosaic_0001>

<llo_original>
// kernel: tpu_custom_call.1
$region0: #{tpu_custom_call.1}
  #allocation0 [shape = 'u32[]', space=smem, size = 0x4, offset = 0x4, fixed_abs, tag = 'smem constant byte address 0x4 - core index']
  #allocation1 [shape = 'u32[144,128]{1,0:T(1,128)}', space=vmem, size = 0x12000, scoped, tag = 'internal scratch']
  %s0 = inlined_call_operand.hbm [shape: f32[16,128], index: 0, kind: input, shape index: {}]
  %s1 = inlined_call_operand.vmem [shape: f32[1,128], index: 1, kind: input, shape index: {}]
  %s2 = inlined_call_operand.hbm [shape: f32[128,384], index: 2, kind: input, shape index: {}]
  %s3 = inlined_call_operand.hbm [shape: f32[16,384], index: 3, kind: output, shape index: {}]
  %s4 = sld [smem:[#allocation0]]
  $region30: #{tpu_custom_call.1} parent=0
    _
  %s6 = ssub.s32 1, %s4
  %s7 = scalar_select 0, %s6, %s4
  $region1: #{tpu_custom_call.1} parent=0
    #allocation2 [shape = 'u8[8192]{0}', space=vmem, size = 0x2000, scoped, tag = 'input window, operand 0, single buffered']
    #allocation3 [shape = 's32[1]{0}', space=sflag, size = 0x4, scoped, tag = 'scoped memory for tpu_custom_call.1']
    #allocation4 [shape = 's32[1]{0}', space=sflag, size = 0x4, scoped, tag = 'scoped memory for tpu_custom_call.1']
    #allocation5 [shape = 'u8[196608]{0}', space=vmem, size = 0x30000, scoped, tag = 'input window, operand 2, single buffered']
    #allocation6 [shape = 's32[1]{0}', space=sflag, size = 0x4, scoped, tag = 'scoped memory for tpu_custom_call.1']
    #allocation7 [shape = 'u8[24576]{0}', space=vmem, size = 0x6000, scoped, tag = 'output window, operand 0, single buffered']
    %8 = vsyncpa [#allocation3], 0
    %9 = vsyncpa [#allocation6], 0
    %10 = vsyncpa [#allocation4], 0
    // Predicated region
    $region2: #{tpu_custom_call.1} parent=1 // pred_check
      _
    $region3: #{tpu_custom_call.1} parent=1 // pred_check_branch
      %12 = sbr.rel (0) target = $region5
    $region4: #{tpu_custom_call.1} parent=1 // pred_region
      %s14 = ssub.s32 256, 256
      %15 = vsyncadd [#allocation3], %s14
      %s16 = sshll.u32 [#allocation2], 4
      %s17 = int_to_ptr.vmem [resolvable:$true] %s16
      %22 = dma.hbm_to_vmem [thread:$0]  %s0, 256, %s17, [#allocation3], 128, 128, 8
    $region5: #{tpu_custom_call.1} parent=1 // pred_fallthru
      _
    // Predicated region
    $region6: #{tpu_custom_call.1} parent=1 // pred_check
      _
    $region7: #{tpu_custom_call.1} parent=1 // pred_check_branch
      %24 = sbr.rel (0) target = $region9
    $region8: #{tpu_custom_call.1} parent=1 // pred_region
      _
    $region9: #{tpu_custom_call.1} parent=1 // pred_fallthru
      _
    // Predicated region
    $region10: #{tpu_custom_call.1} parent=1 // pred_check
      _
    $region11: #{tpu_custom_call.1} parent=1 // pred_check_branch
      %26 = sbr.rel (0) target = $region13
    $region12: #{tpu_custom_call.1} parent=1 // pred_region
      %s28 = ssub.s32 6144, 6144
      %29 = vsyncadd [#allocation6], %s28
      %s30 = sshll.u32 [#allocation5], 4
      %s31 = int_to_ptr.vmem [resolvable:$true] %s30
      %36 = dma.hbm_to_vmem [thread:$0]  %s2, 6144, %s31, [#allocation6], 384, 384, 24
    $region13: #{tpu_custom_call.1} parent=1 // pred_fallthru
      _
    // Predicated region
    $region14: #{tpu_custom_call.1} parent=1 // pred_check
      _
    $region15: #{tpu_custom_call.1} parent=1 // pred_check_branch
      %38 = sbr.rel (0) target = $region17
    $region16: #{tpu_custom_call.1} parent=1 // pred_region
      %39 = dma.done [#allocation3], 256
    $region17: #{tpu_custom_call.1} parent=1 // pred_fallthru
      _
    // Predicated region
    $region18: #{tpu_custom_call.1} parent=1 // pred_check
      _
    $region19: #{tpu_custom_call.1} parent=1 // pred_check_branch
      %41 = sbr.rel (0) target = $region21
    $region20: #{tpu_custom_call.1} parent=1 // pred_region
      %42 = dma.done [#allocation6], 6144
    $region21: #{tpu_custom_call.1} parent=1 // pred_fallthru
      _
    %v43 = vld [vmem:[#allocation2] sm:$0xff]
    %v44 = vld [vmem:[#allocation2 + $0x8] sm:$0xff]
    %v45 = vmul.f32 %v43, %v43
    %v46 = vmul.f32 %v44, %v44
    %47 = vadd.xlane.f32.xlu0 %v45
    %v48 = vpop.xlane.xlu0 %47
    %49 = vadd.xlane.f32.xlu0 %v46
    %v50 = vpop.xlane.xlu0 %49
    %v51 = vrcp.pop 128.0
    %v52 = vmul.f32 %v48, %v51
    %v53 = vmul.f32 %v50, %v51
    %v54 = vadd.f32 %v52, 1e-05
    %v55 = vadd.f32 %v53, 1e-05
    %v56 = vrsqrt.pop %v54
    %v57 = vrsqrt.pop %v55
    %v58 = vmul.f32 %v43, %v56
    %v59 = vmul.f32 %v44, %v57
    %v60 = vld [vmem:[%s1] sm:$0x1]
    %v62 = vlaneseq
    %v63 = vshrl.u32 %v62, 7
    %v64 = vsub.s32 0, %v63
    %v65 = vrot.slane %v60, %v64
    %v67 = vmul.f32 %v65, %v58
    %v68 = vmul.f32 %v65, %v59
    %v69 = vld [vmem:[#allocation5] sm:$0xff]
    %v70 = vld [vmem:[#allocation5 + $0x8] sm:$0xff]
    %v71 = vld [vmem:[#allocation5 + $0x10] sm:$0xff]
    %v72 = vld [vmem:[#allocation5 + $0x18] sm:$0xff]
    %v73 = vld [vmem:[#allocation5 + $0x20] sm:$0xff]
    %v74 = vld [vmem:[#allocation5 + $0x28] sm:$0xff]
    %v75 = vld [vmem:[#allocation5 + $0x30] sm:$0xff]
    %v76 = vld [vmem:[#allocation5 + $0x38] sm:$0xff]
    %v77 = vld [vmem:[#allocation5 + $0x40] sm:$0xff]
    %v78 = vld [vmem:[#allocation5 + $0x48] sm:$0xff]
    %v79 = vld [vmem:[#allocation5 + $0x50] sm:$0xff]
    %v80 = vld [vmem:[#allocation5 + $0x58] sm:$0xff]
    %v81 = vld [vmem:[#allocation5 + $0x60] sm:$0xff]
    %v82 = vld [vmem:[#allocation5 + $0x68] sm:$0xff]
    %v83 = vld [vmem:[#allocation5 + $0x70] sm:$0xff]
    %v84 = vld [vmem:[#allocation5 + $0x78] sm:$0xff]
    %v85 = vld [vmem:[#allocation5 + $0x80] sm:$0xff]
    %v86 = vld [vmem:[#allocation5 + $0x88] sm:$0xff]
    %v87 = vld [vmem:[#allocation5 + $0x90] sm:$0xff]
    %v88 = vld [vmem:[#allocation5 + $0x98] sm:$0xff]
    %v89 = vld [vmem:[#allocation5 + $0xa0] sm:$0xff]
    %v90 = vld [vmem:[#allocation5 + $0xa8] sm:$0xff]
    %v91 = vld [vmem:[#allocation5 + $0xb0] sm:$0xff]
    %v92 = vld [vmem:[#allocation5 + $0xb8] sm:$0xff]
    %v93 = vld [vmem:[#allocation5 + $0xc0] sm:$0xff]
    %v94 = vld [vmem:[#allocation5 + $0xc8] sm:$0xff]
    %v95 = vld [vmem:[#allocation5 + $0xd0] sm:$0xff]
    %v96 = vld [vmem:[#allocation5 + $0xd8] sm:$0xff]
    %v97 = vld [vmem:[#allocation5 + $0xe0] sm:$0xff]
    %v98 = vld [vmem:[#allocation5 + $0xe8] sm:$0xff]
    %v99 = vld [vmem:[#allocation5 + $0xf0] sm:$0xff]
    %v100 = vld [vmem:[#allocation5 + $0xf8] sm:$0xff]
    %v101 = vld [vmem:[#allocation5 + $0x100] sm:$0xff]
    %v102 = vld [vmem:[#allocation5 + $0x108] sm:$0xff]
    %v103 = vld [vmem:[#allocation5 + $0x110] sm:$0xff]
    %v104 = vld [vmem:[#allocation5 + $0x118] sm:$0xff]
    %v105 = vld [vmem:[#allocation5 + $0x120] sm:$0xff]
    %v106 = vld [vmem:[#allocation5 + $0x128] sm:$0xff]
    %v107 = vld [vmem:[#allocation5 + $0x130] sm:$0xff]
    %v108 = vld [vmem:[#allocation5 + $0x138] sm:$0xff]
    %v109 = vld [vmem:[#allocation5 + $0x140] sm:$0xff]
    %v110 = vld [vmem:[#allocation5 + $0x148] sm:$0xff]
    %v111 = vld [vmem:[#allocation5 + $0x150] sm:$0xff]
    %v112 = vld [vmem:[#allocation5 + $0x158] sm:$0xff]
    %v113 = vld [vmem:[#allocation5 + $0x160] sm:$0xff]
    %v114 = vld [vmem:[#allocation5 + $0x168] sm:$0xff]
    %v115 = vld [vmem:[#allocation5 + $0x170] sm:$0xff]
    %v116 = vld [vmem:[#allocation5 + $0x178] sm:$0xff]
    %117 = vmatprep.subr.mxu0 %v115
    %118 = vmatpush1.msra.mxu0 %v114
    %119 = vmatprep.subr.mxu0 %v112
    %120 = vmatpush1.msra.mxu0 %v111
    %121 = vmatprep.subr.mxu0 %v109
    %122 = vmatpush1.msra.mxu0 %v108
    %123 = vmatprep.subr.mxu0 %v106
    %124 = vmatpush1.msra.mxu0 %v105
    %125 = vmatprep.subr.mxu0 %v103
    %126 = vmatpush1.msra.mxu0 %v102
    %127 = vmatprep.subr.mxu0 %v100
    %128 = vmatpush1.msra.mxu0 %v99
    %129 = vmatprep.subr.mxu0 %v97
    %130 = vmatpush1.msra.mxu0 %v96
    %131 = vmatprep.subr.mxu0 %v94
    %132 = vmatpush1.msra.mxu0 %v93
    %133 = vmatprep.subr.mxu0 %v91
    %134 = vmatpush1.msra.mxu0 %v90
    %135 = vmatprep.subr.mxu0 %v88
    %136 = vmatpush1.msra.mxu0 %v87
    %137 = vmatprep.subr.mxu0 %v85
    %138 = vmatpush1.msra.mxu0 %v84
    %139 = vmatprep.subr.mxu0 %v82
    %140 = vmatpush1.msra.mxu0 %v81
    %141 = vmatprep.subr.mxu0 %v79
    %142 = vmatpush1.msra.mxu0 %v78
    %143 = vmatprep.subr.mxu0 %v76
    %144 = vmatpush1.msra.mxu0 %v75
    %145 = vmatprep.subr.mxu0 %v73
    %146 = vmatpush1.msra.mxu0 %v72
    %147 = vmatprep.subr.mxu0 %v70
    %148 = vmatpush1.msra.mxu0 %v69
    %149 = vmatprep.subr.mxu0 0.0
    %150 = vmatpush2.msra.mxu0 0.0
    %151 = vmatprep.subr.mxu0 0.0
    %152 = vmatpush2.msra.mxu0 0.0
    %153 = vmatprep.subr.mxu0 0.0
    %154 = vmatpush2.msra.mxu0 0.0
    %155 = vmatprep.subr.mxu0 0.0
    %156 = vmatpush2.msra.mxu0 0.0
    %157 = vmatprep.subr.mxu0 0.0
    %158 = vmatpush2.msra.mxu0 0.0
    %159 = vmatprep.subr.mxu0 0.0
    %160 = vmatpush2.msra.mxu0 0.0
    %161 = vmatprep.subr.mxu0 0.0
    %162 = vmatpush2.msra.mxu0 0.0
    %163 = vmatprep.subr.mxu0 0.0
    %164 = vmatpush2.msra.mxu0 0.0
    %165 = vmatprep.subr.mxu0 0.0
    %166 = vmatpush2.msra.mxu0 0.0
    %167 = vmatprep.subr.mxu0 0.0
    %168 = vmatpush2.msra.mxu0 0.0
    %169 = vmatprep.subr.mxu0 0.0
    %170 = vmatpush2.msra.mxu0 0.0
    %171 = vmatprep.subr.mxu0 0.0
    %172 = vmatpush2.msra.mxu0 0.0
    %173 = vmatprep.subr.mxu0 0.0
    %174 = vmatpush2.msra.mxu0 0.0
    %175 = vmatprep.subr.mxu0 0.0
    %176 = vmatpush2.msra.mxu0 0.0
    %177 = vmatprep.subr.mxu0 0.0
    %178 = vmatpush2.msra.mxu0 0.0
    %179 = vmatprep.subr.mxu0 0.0
    %180 = vmatpush2.msra.mxu0 0.0
    %181 = vmatprep.mubr.f32.mxu0 0.0
    %182 = vmatmul.mubr.f32.gmra.mxu0 %v67
    %v183 = vpop.f32.mrf.mxu0
    %v184 = vadd.f32 0.0, %v183
    %v185 = vpop.f32.mrf.mxu0
    %v186 = vadd.f32 0.0, %v185
    %187 = vmatprep.mubr.f32.mxu0 0.0
    %188 = vmatmul.mubr.f32.gmra.mxu0 %v68
    %v189 = vpop.f32.mrf.mxu0
    %v190 = vadd.f32 0.0, %v189
    %v191 = vpop.f32.mrf.mxu0
    %v192 = vadd.f32 0.0, %v191
    %193 = vdwg.mxu0
    %194 = vmatprep.subr.mxu0 0.0
    %195 = vmatpush1.msra.mxu0 %v116
    %196 = vmatprep.subr.mxu0 0.0
    %197 = vmatpush1.msra.mxu0 %v113
    %198 = vmatprep.subr.mxu0 0.0
    %199 = vmatpush1.msra.mxu0 %v110
    %200 = vmatprep.subr.mxu0 0.0
    %201 = vmatpush1.msra.mxu0 %v107
    %202 = vmatprep.subr.mxu0 0.0
    %203 = vmatpush1.msra.mxu0 %v104
    %204 = vmatprep.subr.mxu0 0.0
    %205 = vmatpush1.msra.mxu0 %v101
    %206 = vmatprep.subr.mxu0 0.0
    %207 = vmatpush1.msra.mxu0 %v98
    %208 = vmatprep.subr.mxu0 0.0
    %209 = vmatpush1.msra.mxu0 %v95
    %210 = vmatprep.subr.mxu0 0.0
    %211 = vmatpush1.msra.mxu0 %v92
    %212 = vmatprep.subr.mxu0 0.0
    %213 = vmatpush1.msra.mxu0 %v89
    %214 = vmatprep.subr.mxu0 0.0
    %215 = vmatpush1.msra.mxu0 %v86
    %216 = vmatprep.subr.mxu0 0.0
    %217 = vmatpush1.msra.mxu0 %v83
    %218 = vmatprep.subr.mxu0 0.0
    %219 = vmatpush1.msra.mxu0 %v80
    %220 = vmatprep.subr.mxu0 0.0
    %221 = vmatpush1.msra.mxu0 %v77
    %222 = vmatprep.subr.mxu0 0.0
    %223 = vmatpush1.msra.mxu0 %v74
    %224 = vmatprep.subr.mxu0 0.0
    %225 = vmatpush1.msra.mxu0 %v71
    %226 = vmatprep.subr.mxu0 0.0
    %227 = vmatpush2.msra.mxu0 0.0
    %228 = vmatprep.subr.mxu0 0.0
    %229 = vmatpush2.msra.mxu0 0.0
    %230 = vmatprep.subr.mxu0 0.0
    %231 = vmatpush2.msra.mxu0 0.0
    %232 = vmatprep.subr.mxu0 0.0
    %233 = vmatpush2.msra.mxu0 0.0
    %234 = vmatprep.subr.mxu0 0.0
    %235 = vmatpush2.msra.mxu0 0.0
    %236 = vmatprep.subr.mxu0 0.0
    %237 = vmatpush2.msra.mxu0 0.0
    %238 = vmatprep.subr.mxu0 0.0
    %239 = vmatpush2.msra.mxu0 0.0
    %240 = vmatprep.subr.mxu0 0.0
    %241 = vmatpush2.msra.mxu0 0.0
    %242 = vmatprep.subr.mxu0 0.0
    %243 = vmatpush2.msra.mxu0 0.0
    %244 = vmatprep.subr.mxu0 0.0
    %245 = vmatpush2.msra.mxu0 0.0
    %246 = vmatprep.subr.mxu0 0.0
    %247 = vmatpush2.msra.mxu0 0.0
    %248 = vmatprep.subr.mxu0 0.0
    %249 = vmatpush2.msra.mxu0 0.0
    %250 = vmatprep.subr.mxu0 0.0
    %251 = vmatpush2.msra.mxu0 0.0
    %252 = vmatprep.subr.mxu0 0.0
    %253 = vmatpush2.msra.mxu0 0.0
    %254 = vmatprep.subr.mxu0 0.0
    %255 = vmatpush2.msra.mxu0 0.0
    %256 = vmatprep.subr.mxu0 0.0
    %257 = vmatpush2.msra.mxu0 0.0
    %258 = vmatprep.mubr.f32.mxu0 0.0
    %259 = vmatmul.mubr.f32.gmra.mxu0 %v67
    %v260 = vpop.f32.mrf.mxu0
    %v261 = vadd.f32 0.0, %v260
    %v262 = vpop.f32.mrf.mxu0
    %263 = vmatprep.mubr.f32.mxu0 0.0
    %264 = vmatmul.mubr.f32.gmra.mxu0 %v68
    %v265 = vpop.f32.mrf.mxu0
    %v266 = vadd.f32 0.0, %v265
    %v267 = vpop.f32.mrf.mxu0
    %268 = vdwg.mxu0
    %269 = vst [vmem:[#allocation7] sm:$0xff] %v184
    %270 = vst [vmem:[#allocation7 + $0x8] sm:$0xff] %v186
    %271 = vst [vmem:[#allocation7 + $0x10] sm:$0xff] %v261
    %272 = vst [vmem:[#allocation7 + $0x18] sm:$0xff] %v190
    %273 = vst [vmem:[#allocation7 + $0x20] sm:$0xff] %v192
    %274 = vst [vmem:[#allocation7 + $0x28] sm:$0xff] %v266
    // Predicated region
    $region22: #{tpu_custom_call.1} parent=1 // pred_check
      _
    $region23: #{tpu_custom_call.1} parent=1 // pred_check_branch
      %276 = sbr.rel (0) target = $region25
    $region24: #{tpu_custom_call.1} parent=1 // pred_region
      %s278 = ssub.s32 768, 768
      %279 = vsyncadd [#allocation4], %s278
      %s280 = sshll.u32 [#allocation7], 4
      %s281 = int_to_ptr.vmem [resolvable:$true] %s280
      %286 = dma.vmem_to_hbm [thread:$0]  %s281, 768, %s3, [#allocation4], 384, 384, 24
    $region25: #{tpu_custom_call.1} parent=1 // pred_fallthru
      _
    // Predicated region
    $region26: #{tpu_custom_call.1} parent=1 // pred_check
      _
    $region27: #{tpu_custom_call.1} parent=1 // pred_check_branch
      %288 = sbr.rel (0) target = $region29
    $region28: #{tpu_custom_call.1} parent=1 // pred_region
      %289 = dma.done [#allocation4], 768
    $region29: #{tpu_custom_call.1} parent=1 // pred_fallthru
      _
    %290 = vsyncpa [#allocation3], 1
    %291 = vsyncpa [#allocation6], 1
    %292 = vsyncpa [#allocation4], 1

</llo_original>
